<compile_context>
chip_gen: v5e
topology: v5e:2x2
jax: 0.10.0
libtpu: 0.0.40
codegen_flags: <defaults>
</compile_context>

<pallas_src>
import functools
import math

import jax
import jax.numpy as jnp
from jax import lax
from jax.experimental import pallas as pl
from jax.experimental.pallas import tpu as pltpu


def _round_up(x: int, m: int) -> int:
    return (x + m - 1) // m * m


def _physical_vmem_bytes() -> int:
    """Physical VMEM per core; conservative 64 MiB (v7x) fallback."""
    try:
        info = pltpu.get_tpu_info()
        v = getattr(info, "vmem_capacity_bytes", None)
        if v:
            return int(v)
    except Exception:
        pass
    return 64 * 1024 * 1024


def _select_kth_softmax_kernel(w_ref, x_ref, o_ref):
    """w_ref: (8, D) bf16 selection matrix (loop-invariant, resident in VMEM).
       x_ref: (TR, D) input tile.
       o_ref: (1, TR) lane-dense output tile."""
    x = x_ref[...].astype(jnp.float32)

    # Numerically stable exp (the max cancels in the softmax ratio).
    m = jnp.max(x, axis=-1, keepdims=True)            # (TR, 1)
    e = jnp.exp(x - m)                                # (TR, D)  -- EUP, in (0, 1]

    # hi/lo split so the selection matmul runs at native bf16 MXU rate while
    # reconstructing the f32 result to ~2^-17 relative error.
    e_hi = e.astype(jnp.bfloat16)
    e_lo = (e - e_hi.astype(jnp.float32)).astype(jnp.bfloat16)

    w = w_ref[...]                                    # (8, D) bf16, {0, 1}
    dims = (((1,), (1,)), ((), ()))                   # contract the D axis (NT)

    # (8, TR) = W @ e^T on the MXU: row 0 = denominator, row 1 = selected
    # numerator, both lane-major -> final store is a dense (1, TR) row.
    res = lax.dot_general(w, e_hi, dimension_numbers=dims,
                          preferred_element_type=jnp.float32)
    res = res + lax.dot_general(w, e_lo, dimension_numbers=dims,
                                preferred_element_type=jnp.float32)

    denom = res[0:1, :]                               # (1, TR), >= 1
    num = res[1:2, :]                                 # (1, TR)

    inv = pl.reciprocal(denom, approx=True)           # EUP vrcp
    inv = inv * (2.0 - denom * inv)                   # one Newton step -> ~f32

    o_ref[...] = (num * inv).astype(o_ref.dtype)


def select_kth_softmax(x: jax.Array, k: int, *, tile_rows=None) -> jax.Array:
    orig_lead = x.shape[:-1]
    D = int(x.shape[-1])
    k = int(k)
    if k < 0:
        k += D
    if not 0 <= k < D:
        raise ValueError(f"k={k} out of range for softmax width D={D}")

    R = math.prod(orig_lead) if orig_lead else 1
    if R == 0:
        return jnp.zeros(orig_lead, x.dtype)
    x2 = x.reshape(R, D)

    # Loop-invariant selection matrix: row 0 sums each row (denominator),
    # row 1 picks column k (numerator); rows 2..7 are zero padding so the
    # MXU operand is 8 sublanes tall.  {0,1} is bf16-exact.
    w = jnp.zeros((8, D), jnp.float32).at[0, :].set(1.0).at[1, k].set(1.0)
    w = w.astype(jnp.bfloat16)

    # --- VMEM budgets (hardware-derived, not hard-coded to one chip) --------
    vmem_phys = _physical_vmem_bytes()
    vmem_ceiling = (vmem_phys * 13) // 16          # ~52 MiB on v7x, ~104 MiB on v5e/v6e
    per_buffer_budget = vmem_phys // 8             # 8 MiB (v7x) / 16 MiB (v5e/v6e)

    lanes_pad = _round_up(D, 128)                  # VMEM lane padding of the tile
    per_row_vmem = lanes_pad * 4                   # f32 bytes per row once in VMEM

    # --- tile-size selection -------------------------------------------------
    if tile_rows is None:
        tr_budget = per_buffer_budget // per_row_vmem
        # 5x accounting: 2x pipelined input + in-kernel x, e, e_hi+e_lo temporaries
        tr_vmem_cap = max(0, (vmem_ceiling - (4 << 20)) // (5 * per_row_vmem))
        tr = min(tr_budget, tr_vmem_cap)
        tr = max(128, min(8192, (tr // 128) * 128))
        # Keep >= ~8 grid steps (>= ~4 per v7x TensorCore) when R permits so the
        # pipeline overlaps DMA with compute; 512-row floor keeps DMAs >= ~0.25 MiB.
        target_steps = 8
        if R > target_steps * 128:
            tr = min(tr, max(512, _round_up(pl.cdiv(R, target_steps), 128)))
    else:
        tr = max(8, int(tile_rows))

    if R <= tr:
        tr = R                              # single block == full array
    else:
        # multi-block: lane-dense output block must be a multiple of 128 lanes
        tr = max(128, (tr // 128) * 128)

    grid_rows = pl.cdiv(R, tr)

    # VMEM need: double-buffered input + in-kernel temporaries (x, e, e_hi/e_lo)
    # + resident W + double-buffered output row + matmul result.
    vmem_need = (5 * tr * per_row_vmem
                 + 2 * 8 * lanes_pad * 2
                 + (2 + 8) * _round_up(tr, 128) * 4)
    if vmem_need > vmem_ceiling:
        # TODO(synk): D-tiled online-softmax (flash-style) path for vocab-scale D.
        raise NotImplementedError(
            f"softmax width D={D} too large for the single-pass row-tiled kernel")
    vmem_limit = int(min(vmem_ceiling, max(16 * 1024 * 1024, vmem_need + (4 << 20))))

    itemsize = jnp.dtype(x.dtype).itemsize
    cost = pl.CostEstimate(
        flops=3 * R * D + 2 * 2 * 8 * D * R,        # elementwise + hi/lo selection matmuls
        transcendentals=R * D + R,                  # exp + reciprocal
        bytes_accessed=R * D * itemsize + R * itemsize + 8 * D * 2)

    out2 = pl.pallas_call(
        _select_kth_softmax_kernel,
        out_shape=jax.ShapeDtypeStruct((1, R), x.dtype),
        grid_spec=pltpu.PrefetchScalarGridSpec(
            num_scalar_prefetch=0,
            grid=(grid_rows,),
            in_specs=[
                pl.BlockSpec((8, D), lambda i: (0, 0)),      # W: constant block
                pl.BlockSpec((tr, D), lambda i: (i, 0)),     # x: row tile
            ],
            out_specs=pl.BlockSpec((1, tr), lambda i: (0, i)),
        ),
        compiler_params=pltpu.CompilerParams(
            dimension_semantics=("parallel",),
            vmem_limit_bytes=vmem_limit),
        cost_estimate=cost,
    )(w, x2)

    return out2.reshape(orig_lead)


if __name__ == "__main__":
    key = jax.random.PRNGKey(0)
    k1, k2, k3, k4 = jax.random.split(key, 4)

    # Case 1: module-like small shape (softmax over last dim, select k-th).
    x1 = jax.random.normal(k1, (2, 4, 16, 16), dtype=jnp.float32)
    out1 = jax.block_until_ready(select_kth_softmax(x1, 3))
    ref1 = jax.nn.softmax(x1, axis=-1)[..., 3]
    assert out1.shape == x1.shape[:-1]
    assert jnp.allclose(out1, ref1, atol=1e-5, rtol=1e-4), "case 1 mismatch"

    # Case 2: multi-block grid with a ragged last row tile (R=1040, D=16).
    x2 = jax.random.normal(k2, (2, 520, 16), dtype=jnp.float32) * 4.0
    out2 = jax.block_until_ready(select_kth_softmax(x2, 5, tile_rows=128))
    ref2 = jax.nn.softmax(x2, axis=-1)[..., 5]
    assert jnp.allclose(out2, ref2, atol=1e-5, rtol=1e-4), "case 2 mismatch"

    # Case 3: non-128-multiple softmax width + negative k indexing.
    x3 = jax.random.normal(k3, (8, 33, 200), dtype=jnp.float32)
    out3 = jax.block_until_ready(select_kth_softmax(x3, -1, tile_rows=128))
    ref3 = jax.nn.softmax(x3, axis=-1)[..., -1]
    assert jnp.allclose(out3, ref3, atol=1e-5, rtol=1e-4), "case 3 mismatch"

    # Case 4: auto-tiled path with multiple pipelined grid steps (R=4096, D=256).
    x4 = jax.random.normal(k4, (16, 256, 256), dtype=jnp.float32)
    out4 = jax.block_until_ready(select_kth_softmax(x4, 7))
    ref4 = jax.nn.softmax(x4, axis=-1)[..., 7]
    assert jnp.allclose(out4, ref4, atol=1e-5, rtol=1e-4), "case 4 mismatch"

    print("KERNEL_OK")
</pallas_src>

<mosaic_0001>
module attributes {stable_mosaic.version = 11 : i64} {
  func.func @_select_kth_softmax_kernel(%arg0: i32, %arg1: memref<8x16xbf16, #tpu.memory_space<vmem>>, %arg2: memref<128x16xf32, #tpu.memory_space<vmem>>, %arg3: memref<1x128xf32, #tpu.memory_space<vmem>>) attributes {dimension_semantics = [#tpu.dimension_semantics<parallel>], iteration_bounds = array<i64: 1>, scalar_prefetch = 0 : i64, scratch_operands = 0 : i64, tpu.core_type = #tpu.core_type<tc>, window_params = [{pipeline_mode = #tpu.pipeline_mode<synchronous>, transform_indices = @transform_0, window_bounds = array<i64: 8, 16>}, {transform_indices = @transform_1, window_bounds = array<i64: 128, 16>}, {transform_indices = @transform_2, window_bounds = array<i64: 1, 128>}]} {
    %c0 = arith.constant 0 : index
    %c0_0 = arith.constant 0 : index
    %0 = vector.load %arg2[%c0, %c0_0] : memref<128x16xf32, #tpu.memory_space<vmem>>, vector<128x16xf32>
    %cst = arith.constant dense<0xFF800000> : vector<128xf32>
    %1 = vector.multi_reduction <maximumf>, %0, %cst [1] : vector<128x16xf32> to vector<128xf32>
    %2 = vector.shape_cast %1 : vector<128xf32> to vector<128x1xf32>
    %3 = vector.broadcast %2 : vector<128x1xf32> to vector<128x16xf32>
    %4 = arith.subf %0, %3 : vector<128x16xf32>
    %5 = math.exp %4 : vector<128x16xf32>
    %6 = arith.truncf %5 : vector<128x16xf32> to vector<128x16xbf16>
    %7 = arith.extf %6 : vector<128x16xbf16> to vector<128x16xf32>
    %8 = arith.subf %5, %7 : vector<128x16xf32>
    %9 = arith.truncf %8 : vector<128x16xf32> to vector<128x16xbf16>
    %c0_1 = arith.constant 0 : index
    %c0_2 = arith.constant 0 : index
    %10 = vector.load %arg1[%c0_1, %c0_2] : memref<8x16xbf16, #tpu.memory_space<vmem>>, vector<8x16xbf16>
    %cst_3 = arith.constant dense<0.000000e+00> : vector<8x128xf32>
    %11 = tpu.matmul %10, %6, %cst_3 {dimension_numbers = #tpu.dot_dimension_numbers<[1], [1], [0], [0], [0, 0, 1, 0], [], []>} : vector<8x16xbf16>, vector<128x16xbf16>, vector<8x128xf32> -> vector<8x128xf32>
    %cst_4 = arith.constant dense<0.000000e+00> : vector<8x128xf32>
    %12 = tpu.matmul %10, %9, %cst_4 {dimension_numbers = #tpu.dot_dimension_numbers<[1], [1], [0], [0], [0, 0, 1, 0], [], []>} : vector<8x16xbf16>, vector<128x16xbf16>, vector<8x128xf32> -> vector<8x128xf32>
    %13 = arith.addf %11, %12 : vector<8x128xf32>
    %14 = vector.extract_strided_slice %13 {offsets = [0, 0], sizes = [1, 128], strides = [1, 1]} : vector<8x128xf32> to vector<1x128xf32>
    %15 = vector.extract_strided_slice %13 {offsets = [1, 0], sizes = [1, 128], strides = [1, 1]} : vector<8x128xf32> to vector<1x128xf32>
    %16 = tpu.reciprocal %14 {approx = true} : vector<1x128xf32> -> vector<1x128xf32>
    %17 = arith.mulf %14, %16 : vector<1x128xf32>
    %cst_5 = arith.constant 2.000000e+00 : f32
    %18 = vector.broadcast %cst_5 : f32 to vector<1x128xf32>
    %19 = arith.subf %18, %17 : vector<1x128xf32>
    %20 = arith.mulf %16, %19 : vector<1x128xf32>
    %21 = arith.mulf %15, %20 : vector<1x128xf32>
    %c0_6 = arith.constant 0 : index
    %c0_7 = arith.constant 0 : index
    %22 = vector.load %arg3[%c0_6, %c0_7] : memref<1x128xf32, #tpu.memory_space<vmem>>, vector<1x128xf32>
    tpu.vector_store %arg3[%c0_6, %c0_7], %21 {strides = array<i32>} : memref<1x128xf32, #tpu.memory_space<vmem>>, vector<1x128xf32>,
    return
  }
  func.func @transform_0(%arg0: i32) -> (i32, i32) {
    %c0_i32 = arith.constant 0 : i32
    %c0_i32_0 = arith.constant 0 : i32
    %c0_i32_1 = arith.constant 0 : i32
    return %c0_i32, %c0_i32_0 : i32, i32
  }
  func.func @transform_1(%arg0: i32) -> (i32, i32) {
    %c0_i32 = arith.constant 0 : i32
    %c0_i32_0 = arith.constant 0 : i32
    return %arg0, %c0_i32 : i32, i32
  }
  func.func @transform_2(%arg0: i32) -> (i32, i32) {
    %c0_i32 = arith.constant 0 : i32
    %c0_i32_0 = arith.constant 0 : i32
    return %c0_i32, %arg0 : i32, i32
  }
}

</mosaic_0001>

<llo_original>
// kernel: tpu_custom_call.1
$region0: #{tpu_custom_call.1}
  #allocation0 [shape = 'u32[]', space=smem, size = 0x4, offset = 0x4, fixed_abs, tag = 'smem constant byte address 0x4 - core index']
  #allocation1 [shape = 'u32[72,128]{1,0:T(1,128)}', space=vmem, size = 0x9000, scoped, tag = 'internal scratch']
  %s0 = inlined_call_operand.vmem [shape: bf16[8,16], index: 0, kind: input, shape index: {}]
  %s1 = inlined_call_operand.vmem [shape: f32[128,16], index: 1, kind: input, shape index: {}]
  %s2 = inlined_call_operand.hbm [shape: f32[1,128], index: 2, kind: output, shape index: {}]
  %s3 = sld [smem:[#allocation0]]
  $region18: #{tpu_custom_call.1} parent=0
    _
  %s5 = ssub.s32 1, %s3
  %s6 = scalar_select 0, %s5, %s3
  $region1: #{tpu_custom_call.1} parent=0
    #allocation2 [shape = 'u8[512]{0}', space=vmem, size = 0x400, scoped, tag = 'output window, operand 0, single buffered']
    #allocation3 [shape = 's32[1]{0}', space=sflag, size = 0x4, scoped, tag = 'scoped memory for tpu_custom_call.1']
    %7 = vsyncpa [#allocation3], 0
    // Predicated region
    $region2: #{tpu_custom_call.1} parent=1 // pred_check
      _
    $region3: #{tpu_custom_call.1} parent=1 // pred_check_branch
      %9 = sbr.rel (0) target = $region5
    $region4: #{tpu_custom_call.1} parent=1 // pred_region
      _
    $region5: #{tpu_custom_call.1} parent=1 // pred_fallthru
      _
    // Predicated region
    $region6: #{tpu_custom_call.1} parent=1 // pred_check
      _
    $region7: #{tpu_custom_call.1} parent=1 // pred_check_branch
      %11 = sbr.rel (0) target = $region9
    $region8: #{tpu_custom_call.1} parent=1 // pred_region
      _
    $region9: #{tpu_custom_call.1} parent=1 // pred_fallthru
      _
    %v12 = vld [vmem:[%s1] sm:$0xff]
    %v13 = vld [vmem:[%s1 + $0x8] sm:$0xff]
    %v14 = vld [vmem:[%s1 + $0x10] sm:$0xff]
    %v15 = vld [vmem:[%s1 + $0x18] sm:$0xff]
    %v16 = vld [vmem:[%s1 + $0x20] sm:$0xff]
    %v17 = vld [vmem:[%s1 + $0x28] sm:$0xff]
    %v18 = vld [vmem:[%s1 + $0x30] sm:$0xff]
    %v19 = vld [vmem:[%s1 + $0x38] sm:$0xff]
    %v20 = vld [vmem:[%s1 + $0x40] sm:$0xff]
    %v21 = vld [vmem:[%s1 + $0x48] sm:$0xff]
    %v22 = vld [vmem:[%s1 + $0x50] sm:$0xff]
    %v23 = vld [vmem:[%s1 + $0x58] sm:$0xff]
    %v24 = vld [vmem:[%s1 + $0x60] sm:$0xff]
    %v25 = vld [vmem:[%s1 + $0x68] sm:$0xff]
    %v26 = vld [vmem:[%s1 + $0x70] sm:$0xff]
    %v27 = vld [vmem:[%s1 + $0x78] sm:$0xff]
    %vm28 = vcmask 130048
    %v29 = vsel %vm28, %v12, -inf
    %30 = vmax.xlane.f32.xlu0 %v29
    %v31 = vpop.xlane.xlu0 %30
    %v32 = vsel %vm28, %v13, -inf
    %33 = vmax.xlane.f32.xlu0 %v32
    %v34 = vpop.xlane.xlu0 %33
    %v35 = vsel %vm28, %v14, -inf
    %36 = vmax.xlane.f32.xlu0 %v35
    %v37 = vpop.xlane.xlu0 %36
    %v38 = vsel %vm28, %v15, -inf
    %39 = vmax.xlane.f32.xlu0 %v38
    %v40 = vpop.xlane.xlu0 %39
    %v41 = vsel %vm28, %v16, -inf
    %42 = vmax.xlane.f32.xlu0 %v41
    %v43 = vpop.xlane.xlu0 %42
    %v44 = vsel %vm28, %v17, -inf
    %45 = vmax.xlane.f32.xlu0 %v44
    %v46 = vpop.xlane.xlu0 %45
    %v47 = vsel %vm28, %v18, -inf
    %48 = vmax.xlane.f32.xlu0 %v47
    %v49 = vpop.xlane.xlu0 %48
    %v50 = vsel %vm28, %v19, -inf
    %51 = vmax.xlane.f32.xlu0 %v50
    %v52 = vpop.xlane.xlu0 %51
    %v53 = vsel %vm28, %v20, -inf
    %54 = vmax.xlane.f32.xlu0 %v53
    %v55 = vpop.xlane.xlu0 %54
    %v56 = vsel %vm28, %v21, -inf
    %57 = vmax.xlane.f32.xlu0 %v56
    %v58 = vpop.xlane.xlu0 %57
    %v59 = vsel %vm28, %v22, -inf
    %60 = vmax.xlane.f32.xlu0 %v59
    %v61 = vpop.xlane.xlu0 %60
    %v62 = vsel %vm28, %v23, -inf
    %63 = vmax.xlane.f32.xlu0 %v62
    %v64 = vpop.xlane.xlu0 %63
    %v65 = vsel %vm28, %v24, -inf
    %66 = vmax.xlane.f32.xlu0 %v65
    %v67 = vpop.xlane.xlu0 %66
    %v68 = vsel %vm28, %v25, -inf
    %69 = vmax.xlane.f32.xlu0 %v68
    %v70 = vpop.xlane.xlu0 %69
    %v71 = vsel %vm28, %v26, -inf
    %72 = vmax.xlane.f32.xlu0 %v71
    %v73 = vpop.xlane.xlu0 %72
    %v74 = vsel %vm28, %v27, -inf
    %75 = vmax.xlane.f32.xlu0 %v74
    %v76 = vpop.xlane.xlu0 %75
    %v77 = vsub.f32 %v12, %v31
    %v78 = vsub.f32 %v13, %v34
    %v79 = vsub.f32 %v14, %v37
    %v80 = vsub.f32 %v15, %v40
    %v81 = vsub.f32 %v16, %v43
    %v82 = vsub.f32 %v17, %v46
    %v83 = vsub.f32 %v18, %v49
    %v84 = vsub.f32 %v19, %v52
    %v85 = vsub.f32 %v20, %v55
    %v86 = vsub.f32 %v21, %v58
    %v87 = vsub.f32 %v22, %v61
    %v88 = vsub.f32 %v23, %v64
    %v89 = vsub.f32 %v24, %v67
    %v90 = vsub.f32 %v25, %v70
    %v91 = vsub.f32 %v26, %v73
    %v92 = vsub.f32 %v27, %v76
    %v93 = vmul.f32 %v77, 1.442695
    %v94 = vpow.pop %v93
    %v95 = vmul.f32 %v78, 1.442695
    %v96 = vpow.pop %v95
    %v97 = vmul.f32 %v79, 1.442695
    %v98 = vpow.pop %v97
    %v99 = vmul.f32 %v80, 1.442695
    %v100 = vpow.pop %v99
    %v101 = vmul.f32 %v81, 1.442695
    %v102 = vpow.pop %v101
    %v103 = vmul.f32 %v82, 1.442695
    %v104 = vpow.pop %v103
    %v105 = vmul.f32 %v83, 1.442695
    %v106 = vpow.pop %v105
    %v107 = vmul.f32 %v84, 1.442695
    %v108 = vpow.pop %v107
    %v109 = vmul.f32 %v85, 1.442695
    %v110 = vpow.pop %v109
    %v111 = vmul.f32 %v86, 1.442695
    %v112 = vpow.pop %v111
    %v113 = vmul.f32 %v87, 1.442695
    %v114 = vpow.pop %v113
    %v115 = vmul.f32 %v88, 1.442695
    %v116 = vpow.pop %v115
    %v117 = vmul.f32 %v89, 1.442695
    %v118 = vpow.pop %v117
    %v119 = vmul.f32 %v90, 1.442695
    %v120 = vpow.pop %v119
    %v121 = vmul.f32 %v91, 1.442695
    %v122 = vpow.pop %v121
    %v123 = vmul.f32 %v92, 1.442695
    %v124 = vpow.pop %v123
    %v125 = vpack.c.bf16 %v94, %v94
    %v126 = vpack.c.bf16 %v96, %v96
    %v127 = vpack.c.bf16 %v98, %v98
    %v128 = vpack.c.bf16 %v100, %v100
    %v129 = vpack.c.bf16 %v102, %v102
    %v130 = vpack.c.bf16 %v104, %v104
    %v131 = vpack.c.bf16 %v106, %v106
    %v132 = vpack.c.bf16 %v108, %v108
    %v133 = vpack.c.bf16 %v110, %v110
    %v134 = vpack.c.bf16 %v112, %v112
    %v135 = vpack.c.bf16 %v114, %v114
    %v136 = vpack.c.bf16 %v116, %v116
    %v137 = vpack.c.bf16 %v118, %v118
    %v138 = vpack.c.bf16 %v120, %v120
    %v139 = vpack.c.bf16 %v122, %v122
    %v140 = vpack.c.bf16 %v124, %v124
    %v141 = vunpack.c.l.bf16 %v125
    %v142 = vunpack.c.l.bf16 %v126
    %v143 = vunpack.c.l.bf16 %v127
    %v144 = vunpack.c.l.bf16 %v128
    %v145 = vunpack.c.l.bf16 %v129
    %v146 = vunpack.c.l.bf16 %v130
    %v147 = vunpack.c.l.bf16 %v131
    %v148 = vunpack.c.l.bf16 %v132
    %v149 = vunpack.c.l.bf16 %v133
    %v150 = vunpack.c.l.bf16 %v134
    %v151 = vunpack.c.l.bf16 %v135
    %v152 = vunpack.c.l.bf16 %v136
    %v153 = vunpack.c.l.bf16 %v137
    %v154 = vunpack.c.l.bf16 %v138
    %v155 = vunpack.c.l.bf16 %v139
    %v156 = vunpack.c.l.bf16 %v140
    %v157 = vsub.f32 %v94, %v141
    %v158 = vsub.f32 %v96, %v142
    %v159 = vsub.f32 %v98, %v143
    %v160 = vsub.f32 %v100, %v144
    %v161 = vsub.f32 %v102, %v145
    %v162 = vsub.f32 %v104, %v146
    %v163 = vsub.f32 %v106, %v147
    %v164 = vsub.f32 %v108, %v148
    %v165 = vsub.f32 %v110, %v149
    %v166 = vsub.f32 %v112, %v150
    %v167 = vsub.f32 %v114, %v151
    %v168 = vsub.f32 %v116, %v152
    %v169 = vsub.f32 %v118, %v153
    %v170 = vsub.f32 %v120, %v154
    %v171 = vsub.f32 %v122, %v155
    %v172 = vsub.f32 %v124, %v156
    %v173 = vpack.c.bf16 %v158, %v157
    %v174 = vpack.c.bf16 %v160, %v159
    %v175 = vpack.c.bf16 %v162, %v161
    %v176 = vpack.c.bf16 %v164, %v163
    %v177 = vpack.c.bf16 %v166, %v165
    %v178 = vpack.c.bf16 %v168, %v167
    %v179 = vpack.c.bf16 %v170, %v169
    %v180 = vpack.c.bf16 %v172, %v171
    %v181 = vld [vmem:[%s0] sm:$0xf]
    %v183 = vsel %vm28, %v181, 0
    %v186 = vsel %vm28, %v173, 0
    %v189 = vsel %vm28, %v174, 0
    %v192 = vsel %vm28, %v175, 0
    %v195 = vsel %vm28, %v176, 0
    %v198 = vsel %vm28, %v177, 0
    %v201 = vsel %vm28, %v178, 0
    %v204 = vsel %vm28, %v179, 0
    %v207 = vsel %vm28, %v180, 0
    %209 = vmatpush.bf16.xpose.msra.mxu0 %v207
    %210 = vmatpush.bf16.xpose.msra.mxu0 %v204
    %211 = vmatpush.bf16.xpose.msra.mxu0 %v201
    %212 = vmatpush.bf16.xpose.msra.mxu0 %v198
    %213 = vmatpush.bf16.xpose.msra.mxu0 %v195
    %214 = vmatpush.bf16.xpose.msra.mxu0 %v192
    %215 = vmatpush.bf16.xpose.msra.mxu0 %v189
    %216 = vmatpush.bf16.xpose.msra.mxu0 %v186
    %217 = vmatmul.bf16.gmra.mxu0 %v183
    %v218 = vpop.f32.mrf.mxu0
    %v219 = vadd.f32 0.0, %v218
    %v220 = vpop.f32.mrf.mxu0
    %221 = vdwg.mxu0
    %v238 = vunpack.c.l.b16 %v125
    %v239 = vunpack.c.l.b16 %v126
    %v240 = vunpack.c.l.b16 %v127
    %v241 = vunpack.c.l.b16 %v128
    %v242 = vunpack.c.l.b16 %v129
    %v243 = vunpack.c.l.b16 %v130
    %v244 = vunpack.c.l.b16 %v131
    %v245 = vunpack.c.l.b16 %v132
    %v246 = vunpack.c.l.b16 %v133
    %v247 = vunpack.c.l.b16 %v134
    %v248 = vunpack.c.l.b16 %v135
    %v249 = vunpack.c.l.b16 %v136
    %v250 = vunpack.c.l.b16 %v137
    %v251 = vunpack.c.l.b16 %v138
    %v252 = vunpack.c.l.b16 %v139
    %v253 = vunpack.c.l.b16 %v140
    %v254 = vpack.c.b16 %v239, %v238
    %v255 = vpack.c.b16 %v241, %v240
    %v256 = vpack.c.b16 %v243, %v242
    %v257 = vpack.c.b16 %v245, %v244
    %v258 = vpack.c.b16 %v247, %v246
    %v259 = vpack.c.b16 %v249, %v248
    %v260 = vpack.c.b16 %v251, %v250
    %v261 = vpack.c.b16 %v253, %v252
    %v263 = vsel %vm28, %v254, 0
    %v266 = vsel %vm28, %v255, 0
    %v269 = vsel %vm28, %v256, 0
    %v272 = vsel %vm28, %v257, 0
    %v275 = vsel %vm28, %v258, 0
    %v278 = vsel %vm28, %v259, 0
    %v281 = vsel %vm28, %v260, 0
    %v284 = vsel %vm28, %v261, 0
    %286 = vmatpush.bf16.xpose.msra.mxu0 %v284
    %287 = vmatpush.bf16.xpose.msra.mxu0 %v281
    %288 = vmatpush.bf16.xpose.msra.mxu0 %v278
    %289 = vmatpush.bf16.xpose.msra.mxu0 %v275
    %290 = vmatpush.bf16.xpose.msra.mxu0 %v272
    %291 = vmatpush.bf16.xpose.msra.mxu0 %v269
    %292 = vmatpush.bf16.xpose.msra.mxu0 %v266
    %293 = vmatpush.bf16.xpose.msra.mxu0 %v263
    %294 = vmatmul.bf16.gmra.mxu0 %v183
    %v295 = vpop.f32.mrf.mxu0
    %v296 = vadd.f32 %v219, %v295
    %v297 = vpop.f32.mrf.mxu0
    %298 = vdwg.mxu0
    %v299 = vrcp.pop %v296
    %v300 = vmul.f32 %v296, %v299
    %v301 = vsub.f32 2.0, %v300
    %v302 = vmul.f32 %v299, %v301
    %v304 = vrot.slane %v302, 7
    %v306 = vmul.f32 %v296, %v304
    %307 = vst [vmem:[#allocation2 - $0x1] sm:$0x2] %v306
    // Predicated region
    $region10: #{tpu_custom_call.1} parent=1 // pred_check
      _
    $region11: #{tpu_custom_call.1} parent=1 // pred_check_branch
      %309 = sbr.rel (0) target = $region13
    $region12: #{tpu_custom_call.1} parent=1 // pred_region
      %311 = vsyncadd [#allocation3], 0
      %s313 = sshll.u32 [#allocation2], 4
      %s314 = int_to_ptr.vmem [resolvable:$true] %s313
      %s315 = sshll.u32 %s2, 4
      %s316 = int_to_ptr.hbm [resolvable:$true] %s315
      %318 = dma.vmem_to_hbm [thread:$0]  %s314, 16, %s316, [#allocation3]
    $region13: #{tpu_custom_call.1} parent=1 // pred_fallthru
      _
    // Predicated region
    $region14: #{tpu_custom_call.1} parent=1 // pred_check
      _
    $region15: #{tpu_custom_call.1} parent=1 // pred_check_branch
      %320 = sbr.rel (0) target = $region17
    $region16: #{tpu_custom_call.1} parent=1 // pred_region
      %322 = dma.done [#allocation3], 16
    $region17: #{tpu_custom_call.1} parent=1 // pred_fallthru
      _
    %323 = vsyncpa [#allocation3], 1

</llo_original>
